<compile_context>
chip_gen: v7x
topology: tpu7x:2x2x1
jax: 0.10.0
libtpu: 0.0.40
codegen_flags: <defaults>
</compile_context>

<pallas_src>
import functools

import jax
import jax.numpy as jnp
from jax import lax
from jax.experimental import pallas as pl
from jax.experimental.pallas import tpu as pltpu


_LANES = 128
_SUBLANES = 8
_TARGET_BLOCK_BYTES = 1 << 20   # ~1 MiB / input / grid step: ~85% of HBM roofline
_MAX_PACKED_SAMPLES = 8         # keeps the carried f32 accumulators <= 16 vregs


def _pick_unroll(n_strips, nb):
    for u in (8, 4, 2):
        if n_strips % u == 0 and u * nb <= 32:
            return u
    return 1


def _vmem_limit(block_in_bytes, acc_bytes):
    # 2 inputs x 2 pipeline buffers + 2 resident accumulator blocks + slack.
    ws = 2 * 2 * block_in_bytes + 2 * 2 * acc_bytes + (2 << 20)
    return int(min(32 << 20, max(16 << 20, ws)))


def _dice_rows_kernel(p_ref, m_ref, inter_ref, den_ref, *,
                      rows, r, chunks, cps, unroll):
    """Fast path: blocks are (nb, rows, 128); accumulators are (nb, <=8, 128)."""
    s = pl.program_id(1)                 # intra-sample split (parallel)
    c = pl.program_id(2)                 # chunk within split (reduction)
    gc = s * cps + c                     # global chunk index along the sample

    @pl.when(c == 0)
    def _init():
        inter_ref[...] = jnp.zeros_like(inter_ref)
        den_ref[...] = jnp.zeros_like(den_ref)

    strip_rows = inter_ref.shape[1]      # 8, or r when r < 8
    n_strips = rows // strip_rows
    ragged = chunks * rows != r          # compile-time constant

    def accumulate(masked):
        def body(i, carry):
            inter, den = carry
            off = i * strip_rows
            if not isinstance(off, int):
                off = pl.multiple_of(off, strip_rows)
            p = p_ref[:, pl.ds(off, strip_rows), :].astype(jnp.float32)
            m = m_ref[:, pl.ds(off, strip_rows), :].astype(jnp.float32)
            if masked:
                row = (gc * rows + off
                       + lax.broadcasted_iota(jnp.int32, p.shape, 1))
                keep = row < r
                p = jnp.where(keep, p, 0.0)
                m = jnp.where(keep, m, 0.0)
            return inter + p * m, den + (p * p + m * m)

        carry = (inter_ref[...], den_ref[...])
        if n_strips == 1:
            carry = body(0, carry)
        else:
            carry = lax.fori_loop(0, n_strips, body, carry, unroll=unroll)
        inter_ref[...], den_ref[...] = carry

    if ragged:
        # Only the last global chunk pays the iota/compare/select masking.
        @pl.when(gc == chunks - 1)
        def _last():
            accumulate(True)

        @pl.when(gc < chunks - 1)
        def _steady():
            accumulate(False)
    else:
        accumulate(False)


def _dice_cols_kernel(p_ref, m_ref, inter_ref, den_ref, *,
                      cols, f, chunks, unroll):
    """Ragged path: blocks are (nb, cols); accumulators are (nb, 128)."""
    c = pl.program_id(1)

    @pl.when(c == 0)
    def _init():
        inter_ref[...] = jnp.zeros_like(inter_ref)
        den_ref[...] = jnp.zeros_like(den_ref)

    n_strips = cols // _LANES
    ragged = chunks * cols != f

    def accumulate(masked):
        def body(i, carry):
            inter, den = carry
            off = i * _LANES
            if not isinstance(off, int):
                off = pl.multiple_of(off, _LANES)
            p = p_ref[:, pl.ds(off, _LANES)].astype(jnp.float32)
            m = m_ref[:, pl.ds(off, _LANES)].astype(jnp.float32)
            if masked:
                col = (c * cols + off
                       + lax.broadcasted_iota(jnp.int32, p.shape, 1))
                keep = col < f
                p = jnp.where(keep, p, 0.0)
                m = jnp.where(keep, m, 0.0)
            return inter + p * m, den + (p * p + m * m)

        carry = (inter_ref[...], den_ref[...])
        if n_strips == 1:
            carry = body(0, carry)
        else:
            carry = lax.fori_loop(0, n_strips, body, carry, unroll=unroll)
        inter_ref[...], den_ref[...] = carry

    if ragged:
        @pl.when(c == chunks - 1)
        def _last():
            accumulate(True)

        @pl.when(c < chunks - 1)
        def _steady():
            accumulate(False)
    else:
        accumulate(False)


def _dice_partials_rows(p, m):
    """Per-sample sum(p*m) and sum(p*p + m*m); requires f % 128 == 0."""
    num, f = p.shape
    r = f // _LANES
    itemsize = max(p.dtype.itemsize, m.dtype.itemsize)

    p = p.reshape(num, r, _LANES)        # free row-major reshape (no copy)
    m = m.reshape(num, r, _LANES)

    target_rows = max(_SUBLANES, _TARGET_BLOCK_BYTES // (_LANES * itemsize))
    if r >= _SUBLANES:
        rows = min((r // _SUBLANES) * _SUBLANES,
                   (target_rows // _SUBLANES) * _SUBLANES)
        rows = max(_SUBLANES, rows)
    else:
        rows = r                          # tiny sample: whole sample per chunk
    chunks = pl.cdiv(r, rows)

    # Pack samples per grid step so small samples still stream a decent block.
    nb = int(min(num, _MAX_PACKED_SAMPLES, max(1, target_rows // rows)))
    batch_blocks = pl.cdiv(num, nb)

    # Intra-sample split: second "parallel" axis so v7x's 2nd TensorCore gets
    # work even when the batch axis alone is too small.
    nsplit = 2 if (chunks % 2 == 0 and chunks >= 4) else 1
    cps = chunks // nsplit

    acc_rows = _SUBLANES if rows >= _SUBLANES else rows
    unroll = _pick_unroll(rows // acc_rows, nb)

    kernel = functools.partial(_dice_rows_kernel, rows=rows, r=r,
                               chunks=chunks, cps=cps, unroll=unroll)

    out_sds = jax.ShapeDtypeStruct((num, nsplit, acc_rows, _LANES), jnp.float32)
    in_spec = pl.BlockSpec((nb, rows, _LANES),
                           lambda b, s, c: (b, s * cps + c, 0))
    out_spec = pl.BlockSpec((nb, None, acc_rows, _LANES),
                            lambda b, s, c: (b, s, 0, 0))

    inter_p, den_p = pl.pallas_call(
        kernel,
        out_shape=(out_sds, out_sds),
        grid_spec=pltpu.PrefetchScalarGridSpec(
            num_scalar_prefetch=0,
            grid=(batch_blocks, nsplit, cps),
            in_specs=[in_spec, in_spec],
            out_specs=[out_spec, out_spec],
        ),
        compiler_params=pltpu.CompilerParams(
            dimension_semantics=("parallel", "parallel", "arbitrary"),
            vmem_limit_bytes=_vmem_limit(nb * rows * _LANES * itemsize,
                                         nb * acc_rows * _LANES * 4),
        ),
    )(p, m)

    return jnp.sum(inter_p, axis=(1, 2, 3)), jnp.sum(den_p, axis=(1, 2, 3))


def _dice_partials_cols(p, m):
    """Ragged path (f % 128 != 0, f >= 128): no padded HBM copy of the inputs."""
    num, f = p.shape
    itemsize = max(p.dtype.itemsize, m.dtype.itemsize)

    # (8, 128) tiling legality for the (nb, cols) blocks.
    nb = num if num <= _SUBLANES else _SUBLANES
    batch_blocks = pl.cdiv(num, nb)

    target_cols = max(_LANES, _TARGET_BLOCK_BYTES // (nb * itemsize))
    cols = min((f // _LANES) * _LANES, (target_cols // _LANES) * _LANES)
    cols = max(_LANES, cols)
    chunks = pl.cdiv(f, cols)

    unroll = _pick_unroll(cols // _LANES, nb)

    kernel = functools.partial(_dice_cols_kernel, cols=cols, f=f,
                               chunks=chunks, unroll=unroll)

    out_sds = jax.ShapeDtypeStruct((num, _LANES), jnp.float32)
    in_spec = pl.BlockSpec((nb, cols), lambda b, c: (b, c))
    out_spec = pl.BlockSpec((nb, _LANES), lambda b, c: (b, 0))

    inter_p, den_p = pl.pallas_call(
        kernel,
        out_shape=(out_sds, out_sds),
        grid_spec=pltpu.PrefetchScalarGridSpec(
            num_scalar_prefetch=0,
            grid=(batch_blocks, chunks),
            in_specs=[in_spec, in_spec],
            out_specs=[out_spec, out_spec],
        ),
        compiler_params=pltpu.CompilerParams(
            dimension_semantics=("parallel", "arbitrary"),
            vmem_limit_bytes=_vmem_limit(nb * cols * itemsize,
                                         nb * _LANES * 4),
        ),
    )(p, m)

    return jnp.sum(inter_p, axis=1), jnp.sum(den_p, axis=1)


@jax.jit
def dice_loss(output, mask):
    """DICELoss.forward, semantics identical to the PyTorch module (C == 1)."""
    num = output.shape[0]
    # squeeze(x, 1) + the double sum over dims 2,1 reduce over everything but
    # the batch dim (the module implies channel == 1); flatten per sample.
    # TODO(synk): for C > 1 the PyTorch module's behaviour differs (squeeze is
    # a no-op); this implementation assumes the module's implicit C == 1.
    p = output.reshape(num, -1)
    m = mask.reshape(num, -1)
    f = p.shape[1]

    if f % _LANES == 0:
        inter, den = _dice_partials_rows(p, m)
    elif f >= _LANES:
        inter, den = _dice_partials_cols(p, m)
    else:
        # < 128 elements per sample: padding this tiny payload is negligible.
        pad = _LANES - f
        p = jnp.pad(p, ((0, 0), (0, pad)))
        m = jnp.pad(m, ((0, 0), (0, pad)))
        inter, den = _dice_partials_rows(p, m)

    eps = 1e-08
    dice = 2.0 * (inter + eps) / (den + eps)
    return 1.0 - jnp.sum(dice) / num


def _reference(output, mask):
    num = output.shape[0]
    probs = jnp.squeeze(output, 1).astype(jnp.float32)
    msk = jnp.squeeze(mask, 1).astype(jnp.float32)
    inter = jnp.sum(probs * msk, axis=(1, 2))
    den1 = jnp.sum(probs * probs, axis=(1, 2))
    den2 = jnp.sum(msk * msk, axis=(1, 2))
    eps = 1e-08
    dice = 2.0 * (inter + eps) / (den1 + den2 + eps)
    return 1.0 - jnp.sum(dice) / num


if __name__ == "__main__":
    key = jax.random.PRNGKey(0)
    k1, k2, k3, k4 = jax.random.split(key, 4)

    # (N, 1, H, W): the module's squeeze(x, 1) implies a single channel.
    # Fast lane-aligned path: per-sample 64*64 = 4096 = 32 rows of 128 lanes.
    x_shape = (2, 1, 64, 64)
    output = jax.nn.sigmoid(jax.random.normal(k1, x_shape, dtype=jnp.float32))
    mask = (jax.random.uniform(k2, x_shape) > 0.5).astype(jnp.float32)

    loss = jax.block_until_ready(dice_loss(output, mask))
    ref = _reference(output, mask)
    assert jnp.allclose(loss, ref, rtol=1e-5, atol=1e-6), (loss, ref)

    # bf16 inputs stream at half the HBM bytes; accumulation stays in f32.
    out_bf16 = output.astype(jnp.bfloat16)
    msk_bf16 = mask.astype(jnp.bfloat16)
    loss_bf16 = jax.block_until_ready(dice_loss(out_bf16, msk_bf16))
    ref_bf16 = _reference(out_bf16, msk_bf16)
    assert jnp.allclose(loss_bf16, ref_bf16, rtol=1e-5, atol=1e-6), (loss_bf16, ref_bf16)

    # Ragged path: per-sample 20*20 = 400 (not a multiple of 128) is streamed
    # with lane masking of the last column chunk -- no padded HBM copy.
    y_shape = (2, 1, 20, 20)
    output2 = jax.nn.sigmoid(jax.random.normal(k3, y_shape, dtype=jnp.float32))
    mask2 = (jax.random.uniform(k4, y_shape) > 0.5).astype(jnp.float32)

    loss2 = jax.block_until_ready(dice_loss(output2, mask2))
    ref2 = _reference(output2, mask2)
    assert jnp.allclose(loss2, ref2, rtol=1e-5, atol=1e-6), (loss2, ref2)

    print("KERNEL_OK")
</pallas_src>

<mosaic_0001>
module attributes {stable_mosaic.version = 11 : i64} {
  func.func @_dice_rows_kernel(%arg0: i32, %arg1: i32, %arg2: i32, %arg3: memref<2x32x128xf32, #tpu.memory_space<vmem>>, %arg4: memref<2x32x128xf32, #tpu.memory_space<vmem>>, %arg5: memref<2x1x8x128xf32, #tpu.memory_space<vmem>>, %arg6: memref<2x1x8x128xf32, #tpu.memory_space<vmem>>) attributes {dimension_semantics = [#tpu.dimension_semantics<parallel>, #tpu.dimension_semantics<parallel>, #tpu.dimension_semantics<arbitrary>], iteration_bounds = array<i64: 1, 1, 1>, scalar_prefetch = 0 : i64, scratch_operands = 0 : i64, tpu.core_type = #tpu.core_type<tc>, window_params = [{transform_indices = @transform_0, window_bounds = array<i64: 2, 32, 128>}, {transform_indices = @transform_1, window_bounds = array<i64: 2, 32, 128>}, {transform_indices = @transform_2, window_bounds = array<i64: 2, 1, 8, 128>}, {transform_indices = @transform_3, window_bounds = array<i64: 2, 1, 8, 128>}]} {
    %c0_i32 = arith.constant 0 : i32
    %0 = arith.cmpi eq, %arg2, %c0_i32 : i32
    %1 = arith.extui %0 : i1 to i32
    %c0_i32_0 = arith.constant 0 : i32
    %2 = arith.cmpi ne, %1, %c0_i32_0 : i32
    scf.if %2 {
      %cst = arith.constant 0.000000e+00 : f32
      %61 = vector.broadcast %cst : f32 to vector<2x8x128xf32>
      %c0_36 = arith.constant 0 : index
      %c0_37 = arith.constant 0 : index
      %c0_38 = arith.constant 0 : index
      %c0_39 = arith.constant 0 : index
      %62 = vector.load %arg5[%c0_36, %c0_37, %c0_38, %c0_39] : memref<2x1x8x128xf32, #tpu.memory_space<vmem>>, vector<2x1x8x128xf32>
      %63 = vector.shape_cast %62 : vector<2x1x8x128xf32> to vector<2x8x128xf32>
      %64 = vector.shape_cast %61 : vector<2x8x128xf32> to vector<2x1x8x128xf32>
      tpu.vector_store %arg5[%c0_36, %c0_37, %c0_38, %c0_39], %64 {strides = array<i32>} : memref<2x1x8x128xf32, #tpu.memory_space<vmem>>, vector<2x1x8x128xf32>,
      %cst_40 = arith.constant 0.000000e+00 : f32
      %65 = vector.broadcast %cst_40 : f32 to vector<2x8x128xf32>
      %c0_41 = arith.constant 0 : index
      %c0_42 = arith.constant 0 : index
      %c0_43 = arith.constant 0 : index
      %c0_44 = arith.constant 0 : index
      %66 = vector.load %arg6[%c0_41, %c0_42, %c0_43, %c0_44] : memref<2x1x8x128xf32, #tpu.memory_space<vmem>>, vector<2x1x8x128xf32>
      %67 = vector.shape_cast %66 : vector<2x1x8x128xf32> to vector<2x8x128xf32>
      %68 = vector.shape_cast %65 : vector<2x8x128xf32> to vector<2x1x8x128xf32>
      tpu.vector_store %arg6[%c0_41, %c0_42, %c0_43, %c0_44], %68 {strides = array<i32>} : memref<2x1x8x128xf32, #tpu.memory_space<vmem>>, vector<2x1x8x128xf32>,
    } else {
    }
    %c0 = arith.constant 0 : index
    %c0_1 = arith.constant 0 : index
    %c0_2 = arith.constant 0 : index
    %c0_3 = arith.constant 0 : index
    %3 = vector.load %arg5[%c0, %c0_1, %c0_2, %c0_3] : memref<2x1x8x128xf32, #tpu.memory_space<vmem>>, vector<2x1x8x128xf32>
    %4 = vector.shape_cast %3 : vector<2x1x8x128xf32> to vector<2x8x128xf32>
    %c0_4 = arith.constant 0 : index
    %c0_5 = arith.constant 0 : index
    %c0_6 = arith.constant 0 : index
    %c0_7 = arith.constant 0 : index
    %5 = vector.load %arg6[%c0_4, %c0_5, %c0_6, %c0_7] : memref<2x1x8x128xf32, #tpu.memory_space<vmem>>, vector<2x1x8x128xf32>
    %6 = vector.shape_cast %5 : vector<2x1x8x128xf32> to vector<2x8x128xf32>
    %c0_i32_8 = arith.constant 0 : i32
    %c8_i32 = arith.constant 8 : i32
    %7 = arith.muli %c0_i32_8, %c8_i32 : i32
    %8 = tpu.assume_multiple %7, 8 : i32
    %c0_9 = arith.constant 0 : index
    %9 = arith.index_cast %8 : i32 to index
    %c0_10 = arith.constant 0 : index
    %10 = vector.load %arg3[%c0_9, %9, %c0_10] : memref<2x32x128xf32, #tpu.memory_space<vmem>>, vector<2x8x128xf32>
    %c0_11 = arith.constant 0 : index
    %11 = arith.index_cast %8 : i32 to index
    %c0_12 = arith.constant 0 : index
    %12 = vector.load %arg4[%c0_11, %11, %c0_12] : memref<2x32x128xf32, #tpu.memory_space<vmem>>, vector<2x8x128xf32>
    %13 = arith.mulf %10, %12 : vector<2x8x128xf32>
    %14 = arith.addf %4, %13 : vector<2x8x128xf32>
    %15 = arith.mulf %10, %10 : vector<2x8x128xf32>
    %16 = arith.mulf %12, %12 : vector<2x8x128xf32>
    %17 = arith.addf %15, %16 : vector<2x8x128xf32>
    %18 = arith.addf %6, %17 : vector<2x8x128xf32>
    %c1_i32 = arith.constant 1 : i32
    %c8_i32_13 = arith.constant 8 : i32
    %19 = arith.muli %c1_i32, %c8_i32_13 : i32
    %20 = tpu.assume_multiple %19, 8 : i32
    %c0_14 = arith.constant 0 : index
    %21 = arith.index_cast %20 : i32 to index
    %c0_15 = arith.constant 0 : index
    %22 = vector.load %arg3[%c0_14, %21, %c0_15] : memref<2x32x128xf32, #tpu.memory_space<vmem>>, vector<2x8x128xf32>
    %c0_16 = arith.constant 0 : index
    %23 = arith.index_cast %20 : i32 to index
    %c0_17 = arith.constant 0 : index
    %24 = vector.load %arg4[%c0_16, %23, %c0_17] : memref<2x32x128xf32, #tpu.memory_space<vmem>>, vector<2x8x128xf32>
    %25 = arith.mulf %22, %24 : vector<2x8x128xf32>
    %26 = arith.addf %14, %25 : vector<2x8x128xf32>
    %27 = arith.mulf %22, %22 : vector<2x8x128xf32>
    %28 = arith.mulf %24, %24 : vector<2x8x128xf32>
    %29 = arith.addf %27, %28 : vector<2x8x128xf32>
    %30 = arith.addf %18, %29 : vector<2x8x128xf32>
    %c2_i32 = arith.constant 2 : i32
    %c8_i32_18 = arith.constant 8 : i32
    %31 = arith.muli %c2_i32, %c8_i32_18 : i32
    %32 = tpu.assume_multiple %31, 8 : i32
    %c0_19 = arith.constant 0 : index
    %33 = arith.index_cast %32 : i32 to index
    %c0_20 = arith.constant 0 : index
    %34 = vector.load %arg3[%c0_19, %33, %c0_20] : memref<2x32x128xf32, #tpu.memory_space<vmem>>, vector<2x8x128xf32>
    %c0_21 = arith.constant 0 : index
    %35 = arith.index_cast %32 : i32 to index
    %c0_22 = arith.constant 0 : index
    %36 = vector.load %arg4[%c0_21, %35, %c0_22] : memref<2x32x128xf32, #tpu.memory_space<vmem>>, vector<2x8x128xf32>
    %37 = arith.mulf %34, %36 : vector<2x8x128xf32>
    %38 = arith.addf %26, %37 : vector<2x8x128xf32>
    %39 = arith.mulf %34, %34 : vector<2x8x128xf32>
    %40 = arith.mulf %36, %36 : vector<2x8x128xf32>
    %41 = arith.addf %39, %40 : vector<2x8x128xf32>
    %42 = arith.addf %30, %41 : vector<2x8x128xf32>
    %c3_i32 = arith.constant 3 : i32
    %c8_i32_23 = arith.constant 8 : i32
    %43 = arith.muli %c3_i32, %c8_i32_23 : i32
    %44 = tpu.assume_multiple %43, 8 : i32
    %c0_24 = arith.constant 0 : index
    %45 = arith.index_cast %44 : i32 to index
    %c0_25 = arith.constant 0 : index
    %46 = vector.load %arg3[%c0_24, %45, %c0_25] : memref<2x32x128xf32, #tpu.memory_space<vmem>>, vector<2x8x128xf32>
    %c0_26 = arith.constant 0 : index
    %47 = arith.index_cast %44 : i32 to index
    %c0_27 = arith.constant 0 : index
    %48 = vector.load %arg4[%c0_26, %47, %c0_27] : memref<2x32x128xf32, #tpu.memory_space<vmem>>, vector<2x8x128xf32>
    %49 = arith.mulf %46, %48 : vector<2x8x128xf32>
    %50 = arith.addf %38, %49 : vector<2x8x128xf32>
    %51 = arith.mulf %46, %46 : vector<2x8x128xf32>
    %52 = arith.mulf %48, %48 : vector<2x8x128xf32>
    %53 = arith.addf %51, %52 : vector<2x8x128xf32>
    %54 = arith.addf %42, %53 : vector<2x8x128xf32>
    %c4_i32 = arith.constant 4 : i32
    %c0_28 = arith.constant 0 : index
    %c0_29 = arith.constant 0 : index
    %c0_30 = arith.constant 0 : index
    %c0_31 = arith.constant 0 : index
    %55 = vector.load %arg5[%c0_28, %c0_29, %c0_30, %c0_31] : memref<2x1x8x128xf32, #tpu.memory_space<vmem>>, vector<2x1x8x128xf32>
    %56 = vector.shape_cast %55 : vector<2x1x8x128xf32> to vector<2x8x128xf32>
    %57 = vector.shape_cast %50 : vector<2x8x128xf32> to vector<2x1x8x128xf32>
    tpu.vector_store %arg5[%c0_28, %c0_29, %c0_30, %c0_31], %57 {strides = array<i32>} : memref<2x1x8x128xf32, #tpu.memory_space<vmem>>, vector<2x1x8x128xf32>,
    %c0_32 = arith.constant 0 : index
    %c0_33 = arith.constant 0 : index
    %c0_34 = arith.constant 0 : index
    %c0_35 = arith.constant 0 : index
    %58 = vector.load %arg6[%c0_32, %c0_33, %c0_34, %c0_35] : memref<2x1x8x128xf32, #tpu.memory_space<vmem>>, vector<2x1x8x128xf32>
    %59 = vector.shape_cast %58 : vector<2x1x8x128xf32> to vector<2x8x128xf32>
    %60 = vector.shape_cast %54 : vector<2x8x128xf32> to vector<2x1x8x128xf32>
    tpu.vector_store %arg6[%c0_32, %c0_33, %c0_34, %c0_35], %60 {strides = array<i32>} : memref<2x1x8x128xf32, #tpu.memory_space<vmem>>, vector<2x1x8x128xf32>,
    return
  }
  func.func @transform_0(%arg0: i32, %arg1: i32, %arg2: i32) -> (i32, i32, i32) {
    %c1_i32 = arith.constant 1 : i32
    %0 = arith.muli %arg1, %c1_i32 : i32
    %1 = arith.addi %0, %arg2 : i32
    %c0_i32 = arith.constant 0 : i32
    %c0_i32_0 = arith.constant 0 : i32
    return %arg0, %1, %c0_i32 : i32, i32, i32
  }
  func.func @transform_1(%arg0: i32, %arg1: i32, %arg2: i32) -> (i32, i32, i32) {
    %c1_i32 = arith.constant 1 : i32
    %0 = arith.muli %arg1, %c1_i32 : i32
    %1 = arith.addi %0, %arg2 : i32
    %c0_i32 = arith.constant 0 : i32
    %c0_i32_0 = arith.constant 0 : i32
    return %arg0, %1, %c0_i32 : i32, i32, i32
  }
  func.func @transform_2(%arg0: i32, %arg1: i32, %arg2: i32) -> (i32, i32, i32, i32) {
    %c0_i32 = arith.constant 0 : i32
    %c0_i32_0 = arith.constant 0 : i32
    %c0_i32_1 = arith.constant 0 : i32
    return %arg0, %arg1, %c0_i32, %c0_i32_0 : i32, i32, i32, i32
  }
  func.func @transform_3(%arg0: i32, %arg1: i32, %arg2: i32) -> (i32, i32, i32, i32) {
    %c0_i32 = arith.constant 0 : i32
    %c0_i32_0 = arith.constant 0 : i32
    %c0_i32_1 = arith.constant 0 : i32
    return %arg0, %arg1, %c0_i32, %c0_i32_0 : i32, i32, i32, i32
  }
}

</mosaic_0001>

<llo_original>
// kernel: dice_loss.1
$region0: #{dice_loss.1}
  #allocation0 [shape = 'u32[]', space=smem, size = 0x4, offset = 0x4, fixed_abs, tag = 'smem constant byte address 0x4 - core index']
  #allocation1 [shape = 'u32[144,128]{1,0:T(1,128)}', space=vmem, size = 0x12000, scoped, tag = 'internal scratch']
  %s0 = inlined_call_operand.vmem [shape: f32[2,32,128], index: 0, kind: input, shape index: {}]
  %s1 = inlined_call_operand.vmem [shape: f32[2,32,128], index: 1, kind: input, shape index: {}]
  %s2 = inlined_call_operand.vmem [shape: f32[2,1,8,128], index: 2, kind: output, shape index: {0}]
  %s3 = inlined_call_operand.vmem [shape: f32[2,1,8,128], index: 3, kind: output, shape index: {1}]
  %4 = xla_tuple %s2, %s3
  %s5 = sld [smem:[#allocation0]]
  $region30: #{dice_loss.1} parent=0
    _
  %s7 = ssub.s32 1, %s5
  %s8 = scalar_select 0, %s7, %s5
  // Predicated region
  $region2: #{dice_loss.1} parent=0 // pred_check
    _
  $region3: #{dice_loss.1} parent=0 // pred_check_branch
    %10 = sbr.rel (0) target = $region5
  $region4: #{dice_loss.1} parent=0 // pred_region
    %s11 = sadd.s32 0, 0
    %s12 = smul.u32 4, %s11
    %p13 = scmp.lt.s32.totalorder %s12, 3
    %s14 = scalar_select %p13, %s12, 3
    %s15 = smul.addr %s14, 8
    %s16 = scalar_lea.vmem %s0, %s15
    %s17 = sadd.s32 0, 0
    %s18 = smul.u32 4, %s17
  $region5: #{dice_loss.1} parent=0 // pred_fallthru
    _
  // Predicated region
  $region6: #{dice_loss.1} parent=0 // pred_check
    _
  $region7: #{dice_loss.1} parent=0 // pred_check_branch
    %20 = sbr.rel (0) target = $region9
  $region8: #{dice_loss.1} parent=0 // pred_region
    %s21 = sadd.s32 0, 0
    %s22 = smul.u32 4, %s21
    %p23 = scmp.lt.s32.totalorder %s22, 3
    %s24 = scalar_select %p23, %s22, 3
    %s25 = smul.addr %s24, 8
    %s26 = scalar_lea.vmem %s1, %s25
    %s27 = sadd.s32 0, 0
    %s28 = smul.u32 4, %s27
  $region9: #{dice_loss.1} parent=0 // pred_fallthru
    _
  %s29 = sadd.s32 0, 0
  %s30 = smul.u32 4, %s29
  %p31 = scmp.lt.s32.totalorder %s30, 3
  %s32 = scalar_select %p31, %s30, 3
  %s33 = smul.addr %s32, 8
  %s34 = scalar_lea.vmem %s0, %s33
  %s35 = sadd.s32 0, 0
  %s36 = smul.u32 4, %s35
  %p37 = scmp.lt.s32.totalorder %s36, 3
  %s38 = scalar_select %p37, %s36, 3
  %s39 = smul.addr %s38, 8
  %s40 = scalar_lea.vmem %s1, %s39
  %s41 = sadd.s32 0, 0
  %s42 = smul.u32 4, %s41
  %p43 = scmp.lt.s32.totalorder %s42, 3
  %s44 = scalar_select %p43, %s42, 3
  %s45 = smul.addr %s44, 8
  %s46 = scalar_lea.vmem %s0, %s45
  %s47 = sadd.s32 0, 0
  %s48 = smul.u32 4, %s47
  %s49 = sadd.s32 0, 0
  %s50 = smul.u32 4, %s49
  %p51 = scmp.lt.s32.totalorder %s50, 3
  %s52 = scalar_select %p51, %s50, 3
  %s53 = smul.addr %s52, 8
  %s54 = scalar_lea.vmem %s1, %s53
  %s55 = sadd.s32 0, 0
  %s56 = smul.u32 4, %s55
  %p57 = scmp.eq.s32.totalorder 0, 0
  // Predicated region
  $region10: #{dice_loss.1} parent=0 // pred_check
    %p58 = pneg %p57
  $region11: #{dice_loss.1} parent=0 // pred_check_branch
    %60 = sbr.rel (%p58) target = $region13
  $region12: #{dice_loss.1} parent=0 // pred_region
    %61 = vst [vmem:[%s2] sm:$0xff] 0.0
    %62 = vst [vmem:[%s2 + $0x8] sm:$0xff] 0.0
    %63 = vst [vmem:[%s3] sm:$0xff] 0.0
    %64 = vst [vmem:[%s3 + $0x8] sm:$0xff] 0.0
  $region13: #{dice_loss.1} parent=0 // pred_fallthru
    _
  %v65 = vld [vmem:[%s2] sm:$0xff]
  %v66 = vld [vmem:[%s2 + $0x8] sm:$0xff]
  %v67 = vld [vmem:[%s3] sm:$0xff]
  %v68 = vld [vmem:[%s3 + $0x8] sm:$0xff]
  %v69 = vld [vmem:[%s46] sm:$0xff]
  %v70 = vld [vmem:[%s46 + $0x20] sm:$0xff]
  %v71 = vld [vmem:[%s54] sm:$0xff]
  %v72 = vld [vmem:[%s54 + $0x20] sm:$0xff]
  %v73 = vmul.f32 %v69, %v71
  %v74 = vmul.f32 %v70, %v72
  %v75 = vadd.f32 %v65, %v73
  %v76 = vadd.f32 %v66, %v74
  %v77 = vmul.f32 %v69, %v69
  %v78 = vmul.f32 %v70, %v70
  %v79 = vmul.f32 %v71, %v71
  %v80 = vmul.f32 %v72, %v72
  %v81 = vadd.f32 %v77, %v79
  %v82 = vadd.f32 %v78, %v80
  %v83 = vadd.f32 %v67, %v81
  %v84 = vadd.f32 %v68, %v82
  %s85 = scalar_lea.vmem %s46, 8
  %v86 = vld [vmem:[%s85] sm:$0xff]
  %v87 = vld [vmem:[%s85 + $0x20] sm:$0xff]
  %s88 = scalar_lea.vmem %s54, 8
  %v89 = vld [vmem:[%s88] sm:$0xff]
  %v90 = vld [vmem:[%s88 + $0x20] sm:$0xff]
  %v91 = vmul.f32 %v86, %v89
  %v92 = vmul.f32 %v87, %v90
  %v93 = vadd.f32 %v75, %v91
  %v94 = vadd.f32 %v76, %v92
  %v95 = vmul.f32 %v86, %v86
  %v96 = vmul.f32 %v87, %v87
  %v97 = vmul.f32 %v89, %v89
  %v98 = vmul.f32 %v90, %v90
  %v99 = vadd.f32 %v95, %v97
  %v100 = vadd.f32 %v96, %v98
  %v101 = vadd.f32 %v83, %v99
  %v102 = vadd.f32 %v84, %v100
  %s103 = scalar_lea.vmem %s46, 16
  %v104 = vld [vmem:[%s103] sm:$0xff]
  %v105 = vld [vmem:[%s103 + $0x20] sm:$0xff]
  %s106 = scalar_lea.vmem %s54, 16
  %v107 = vld [vmem:[%s106] sm:$0xff]
  %v108 = vld [vmem:[%s106 + $0x20] sm:$0xff]
  %v109 = vmul.f32 %v104, %v107
  %v110 = vmul.f32 %v105, %v108
  %v111 = vadd.f32 %v93, %v109
  %v112 = vadd.f32 %v94, %v110
  %v113 = vmul.f32 %v104, %v104
  %v114 = vmul.f32 %v105, %v105
  %v115 = vmul.f32 %v107, %v107
  %v116 = vmul.f32 %v108, %v108
  %v117 = vadd.f32 %v113, %v115
  %v118 = vadd.f32 %v114, %v116
  %v119 = vadd.f32 %v101, %v117
  %v120 = vadd.f32 %v102, %v118
  %s121 = scalar_lea.vmem %s46, 24
  %v122 = vld [vmem:[%s121] sm:$0xff]
  %v123 = vld [vmem:[%s121 + $0x20] sm:$0xff]
  %s124 = scalar_lea.vmem %s54, 24
  %v125 = vld [vmem:[%s124] sm:$0xff]
  %v126 = vld [vmem:[%s124 + $0x20] sm:$0xff]
  %v127 = vmul.f32 %v122, %v125
  %v128 = vmul.f32 %v123, %v126
  %v129 = vadd.f32 %v111, %v127
  %v130 = vadd.f32 %v112, %v128
  %v131 = vmul.f32 %v122, %v122
  %v132 = vmul.f32 %v123, %v123
  %v133 = vmul.f32 %v125, %v125
  %v134 = vmul.f32 %v126, %v126
  %v135 = vadd.f32 %v131, %v133
  %v136 = vadd.f32 %v132, %v134
  %v137 = vadd.f32 %v119, %v135
  %v138 = vadd.f32 %v120, %v136
  %139 = vst [vmem:[%s2] sm:$0xff] %v129
  %140 = vst [vmem:[%s2 + $0x8] sm:$0xff] %v130
  %141 = vst [vmem:[%s3] sm:$0xff] %v137
  %142 = vst [vmem:[%s3 + $0x8] sm:$0xff] %v138
  // Predicated region
  $region14: #{dice_loss.1} parent=0 // pred_check
    _
  $region15: #{dice_loss.1} parent=0 // pred_check_branch
    %144 = sbr.rel (0) target = $region17
  $region16: #{dice_loss.1} parent=0 // pred_region
    _
  $region17: #{dice_loss.1} parent=0 // pred_fallthru
    _
  // Predicated region
  $region18: #{dice_loss.1} parent=0 // pred_check
    _
  $region19: #{dice_loss.1} parent=0 // pred_check_branch
    %146 = sbr.rel (0) target = $region21
  $region20: #{dice_loss.1} parent=0 // pred_region
    _
  $region21: #{dice_loss.1} parent=0 // pred_fallthru
    _
  // Predicated region
  $region22: #{dice_loss.1} parent=0 // pred_check
    _
  $region23: #{dice_loss.1} parent=0 // pred_check_branch
    %148 = sbr.rel (0) target = $region25
  $region24: #{dice_loss.1} parent=0 // pred_region
    _
  $region25: #{dice_loss.1} parent=0 // pred_fallthru
    _
  // Predicated region
  $region26: #{dice_loss.1} parent=0 // pred_check
    _
  $region27: #{dice_loss.1} parent=0 // pred_check_branch
    %150 = sbr.rel (0) target = $region29
  $region28: #{dice_loss.1} parent=0 // pred_region
    _
  $region29: #{dice_loss.1} parent=0 // pred_fallthru
    _

</llo_original>
